<compile_context>
chip_gen: v6e
topology: v6e:2x2x1
jax: 0.10.0
libtpu: 0.0.40
codegen_flags: <defaults>
</compile_context>

<pallas_src>
import numpy as np
import jax
import jax.numpy as jnp
from jax.experimental import pallas as pl
from jax.experimental.pallas import tpu as pltpu


def _round_up(x: int, m: int) -> int:
    return ((x + m - 1) // m) * m


def _length_regulator_kernel(starts_ref, ends_ref, enc_ref, out_ref):
    # starts_ref/ends_ref: (1, 1, Pp) f32   enc_ref: (1, Pp, C)   out_ref: (1, tT, C)
    Pp = enc_ref.shape[1]
    tT = out_ref.shape[1]
    t0 = pl.program_id(1) * tT                             # first output frame of this tile

    starts = starts_ref[0]                                  # (1, Pp) exclusive prefix sum
    ends = ends_ref[0]                                      # (1, Pp) inclusive prefix sum

    # alignment rows for this T tile: align[t, p] = 1 iff starts[p] <= t0+t < ends[p]
    t_idx = (jax.lax.broadcasted_iota(jnp.int32, (tT, Pp), 0) + t0).astype(jnp.float32)
    align = jnp.logical_and(t_idx >= starts, t_idx < ends)
    align = align.astype(enc_ref.dtype)                     # one-hot rows: exact in any dtype

    # stretched output tile: alignment @ encoder (one-hot rows -> exact row copies)
    out_ref[0] = jnp.dot(align, enc_ref[0],
                         preferred_element_type=jnp.float32).astype(out_ref.dtype)


def length_regulator(encoder_output: jax.Array,
                     log_durations: jax.Array,
                     output_length: int,
                     *,
                     tile_t: int = 1024,
                     vmem_budget_bytes: int = 40 * 1024 * 1024) -> jax.Array:
    """encoder_output: (B, P, C); log_durations: (B, P, 1) -> (B, output_length, C)."""
    B, P, C = encoder_output.shape
    T = int(output_length)
    itemsize = jnp.dtype(encoder_output.dtype).itemsize

    # Pad only the contraction dim (phonemes) to a lane-dense multiple of 128.
    Pp = _round_up(P, 128)

    # Duration decode + prefix sums, hoisted out of the kernel (tiny (B, P) op).
    # Mimics: (2.0**logd + 1e-4).astype(np.uint8) * (logd > 0).
    logd = log_durations[..., 0].astype(jnp.float32)                 # (B, P)
    dur = jnp.floor(jnp.exp2(logd) + 0.0001)
    dur = jnp.where(logd > 0.0, jnp.mod(dur, 256.0), 0.0)            # integer-valued f32
    ends = jnp.cumsum(dur, axis=-1)                                  # inclusive cumsum
    starts = ends - dur                                              # exclusive cumsum
    if Pp > P:
        starts = jnp.pad(starts, ((0, 0), (0, Pp - P)))              # pad cols: start=end=0
        ends = jnp.pad(ends, ((0, 0), (0, Pp - P)))
    starts = starts.reshape(B, 1, Pp)
    ends = ends.reshape(B, 1, Pp)

    enc = encoder_output
    if Pp > P:
        enc = jnp.pad(enc, ((0, 0), (0, Pp - P), (0, 0)))            # zero rows never selected

    # T tile: multiple of 8 (sublane), sized so the double-buffered working set
    # fits the VMEM budget (conservative for v7x's 64 MiB per TensorCore).
    def _vmem_need(t_tile: int) -> int:
        enc_blk = Pp * C * itemsize          # encoder block (resident per batch element)
        out_blk = t_tile * C * itemsize      # output tile
        aux_blk = 2 * Pp * 4                 # starts + ends
        return 2 * (enc_blk + out_blk + aux_blk)   # double-buffered pipeline

    tT = min(_round_up(T, 8), _round_up(int(tile_t), 8))
    while _vmem_need(tT) > vmem_budget_bytes and tT > 8:
        tT = max(8, _round_up(tT // 2, 8))
    n_t = pl.cdiv(T, tT)
    # TODO(synk): for P >> tT, window the P contraction per T tile via scalar prefetch.

    vmem_limit = int(min(max(_vmem_need(tT) + 8 * 1024 * 1024, 16 * 1024 * 1024),
                         64 * 1024 * 1024))

    cost = pl.CostEstimate(
        flops=int(2 * B * n_t * tT * Pp * C),
        transcendentals=0,
        bytes_accessed=int(B * Pp * C * itemsize       # encoder read (once per batch elem)
                           + B * T * C * itemsize      # output write
                           + 2 * B * Pp * 4),          # starts / ends
    )

    out = pl.pallas_call(
        _length_regulator_kernel,
        out_shape=jax.ShapeDtypeStruct((B, T, C), encoder_output.dtype),
        grid_spec=pltpu.PrefetchScalarGridSpec(
            num_scalar_prefetch=0,
            grid=(B, n_t),                                            # T innermost
            in_specs=[
                pl.BlockSpec((1, 1, Pp), lambda b, t: (b, 0, 0)),     # starts (t-invariant)
                pl.BlockSpec((1, 1, Pp), lambda b, t: (b, 0, 0)),     # ends   (t-invariant)
                pl.BlockSpec((1, Pp, C), lambda b, t: (b, 0, 0)),     # enc    (t-invariant)
            ],
            out_specs=pl.BlockSpec((1, tT, C), lambda b, t: (b, t, 0)),
        ),
        compiler_params=pltpu.CompilerParams(
            dimension_semantics=("parallel", "parallel"),
            vmem_limit_bytes=vmem_limit),
        cost_estimate=cost,
    )(starts, ends, enc)

    return out


def _reference_numpy(encoder_output, log_durations, max_length):
    """Pure-numpy port of the PyTorch module for verification."""
    enc = np.asarray(encoder_output, dtype=np.float32)
    logd = np.asarray(log_durations, dtype=np.float32)
    batch_size, n_phonemes, _ = logd.shape
    durations_mask = (logd > 0).astype(np.uint8)
    durations = (np.power(2.0, logd) + 0.0001).astype(np.uint8) * durations_mask
    durations = durations.reshape(batch_size, n_phonemes)
    indexes_space = np.arange(n_phonemes).astype(np.uint16)
    alignment = np.zeros((batch_size, max_length, n_phonemes), dtype=np.float32)
    for i in range(batch_size):
        repeated = np.repeat(indexes_space, durations[i])
        alignment[i, np.arange(len(repeated)), repeated] = 1.0
    return np.matmul(alignment, enc)


if __name__ == "__main__":
    B, P, C = 2, 8, 32
    OUTPUT_LENGTH = 64

    key = jax.random.PRNGKey(0)
    k_enc, k_dur = jax.random.split(key)
    encoder_output = jax.random.normal(k_enc, (B, P, C), dtype=jnp.float32)
    # log durations in [-0.5, 2.5] -> per-phoneme durations of 0..5 frames
    log_durations = jax.random.uniform(k_dur, (B, P, 1), dtype=jnp.float32,
                                       minval=-0.5, maxval=2.5)

    out = length_regulator(encoder_output, log_durations, OUTPUT_LENGTH)
    out = jax.block_until_ready(out)

    ref = _reference_numpy(np.array(encoder_output), np.array(log_durations),
                           OUTPUT_LENGTH)
    assert out.shape == (B, OUTPUT_LENGTH, C)
    assert out.dtype == encoder_output.dtype
    # one-hot alignment -> exact row copies up to MXU internal matmul precision
    np.testing.assert_allclose(np.array(out), ref, rtol=1e-2, atol=1e-3)

    print("KERNEL_OK")
</pallas_src>

<mosaic_0001>
module attributes {stable_mosaic.version = 11 : i64} {
  func.func @_length_regulator_kernel(%arg0: i32, %arg1: i32, %arg2: memref<1x1x128xf32, #tpu.memory_space<vmem>>, %arg3: memref<1x1x128xf32, #tpu.memory_space<vmem>>, %arg4: memref<1x128x32xf32, #tpu.memory_space<vmem>>, %arg5: memref<1x64x32xf32, #tpu.memory_space<vmem>>) attributes {dimension_semantics = [#tpu.dimension_semantics<parallel>, #tpu.dimension_semantics<parallel>], iteration_bounds = array<i64: 2, 1>, scalar_prefetch = 0 : i64, scratch_operands = 0 : i64, tpu.core_type = #tpu.core_type<tc>, window_params = [{transform_indices = @transform_0, window_bounds = array<i64: 1, 1, 128>}, {transform_indices = @transform_1, window_bounds = array<i64: 1, 1, 128>}, {transform_indices = @transform_2, window_bounds = array<i64: 1, 128, 32>}, {transform_indices = @transform_3, window_bounds = array<i64: 1, 64, 32>}]} {
    %c64_i32 = arith.constant 64 : i32
    %0 = arith.muli %arg1, %c64_i32 : i32
    %c0 = arith.constant 0 : index
    %c0_0 = arith.constant 0 : index
    %c0_1 = arith.constant 0 : index
    %1 = vector.load %arg2[%c0, %c0_0, %c0_1] : memref<1x1x128xf32, #tpu.memory_space<vmem>>, vector<1x1x128xf32>
    %2 = vector.shape_cast %1 : vector<1x1x128xf32> to vector<1x128xf32>
    %c0_2 = arith.constant 0 : index
    %c0_3 = arith.constant 0 : index
    %c0_4 = arith.constant 0 : index
    %3 = vector.load %arg3[%c0_2, %c0_3, %c0_4] : memref<1x1x128xf32, #tpu.memory_space<vmem>>, vector<1x1x128xf32>
    %4 = vector.shape_cast %3 : vector<1x1x128xf32> to vector<1x128xf32>
    %5 = tpu.iota {dimensions = array<i32: 0>} : vector<64x128xi32>
    %6 = vector.broadcast %0 : i32 to vector<64x128xi32>
    %7 = arith.addi %5, %6 : vector<64x128xi32>
    %8 = arith.sitofp %7 : vector<64x128xi32> to vector<64x128xf32>
    %9 = vector.broadcast %2 : vector<1x128xf32> to vector<64x128xf32>
    %10 = arith.cmpf oge, %8, %9 : vector<64x128xf32>
    %11 = vector.broadcast %4 : vector<1x128xf32> to vector<64x128xf32>
    %12 = arith.cmpf olt, %8, %11 : vector<64x128xf32>
    %13 = arith.andi %10, %12 : vector<64x128xi1>
    %14 = arith.extui %13 : vector<64x128xi1> to vector<64x128xi32>
    %15 = arith.sitofp %14 : vector<64x128xi32> to vector<64x128xf32>
    %c0_5 = arith.constant 0 : index
    %c0_6 = arith.constant 0 : index
    %c0_7 = arith.constant 0 : index
    %16 = vector.load %arg4[%c0_5, %c0_6, %c0_7] : memref<1x128x32xf32, #tpu.memory_space<vmem>>, vector<1x128x32xf32>
    %17 = vector.shape_cast %16 : vector<1x128x32xf32> to vector<128x32xf32>
    %cst = arith.constant dense<0.000000e+00> : vector<64x32xf32>
    %18 = tpu.matmul %15, %17, %cst {dimension_numbers = #tpu.dot_dimension_numbers<[1], [0], [0], [1], [0, 0, 1, 1], [], []>} : vector<64x128xf32>, vector<128x32xf32>, vector<64x32xf32> -> vector<64x32xf32>
    %c0_8 = arith.constant 0 : index
    %c0_9 = arith.constant 0 : index
    %c0_10 = arith.constant 0 : index
    %19 = vector.load %arg5[%c0_8, %c0_9, %c0_10] : memref<1x64x32xf32, #tpu.memory_space<vmem>>, vector<1x64x32xf32>
    %20 = vector.shape_cast %19 : vector<1x64x32xf32> to vector<64x32xf32>
    %21 = vector.shape_cast %18 : vector<64x32xf32> to vector<1x64x32xf32>
    tpu.vector_store %arg5[%c0_8, %c0_9, %c0_10], %21 {strides = array<i32>} : memref<1x64x32xf32, #tpu.memory_space<vmem>>, vector<1x64x32xf32>,
    return
  }
  func.func @transform_0(%arg0: i32, %arg1: i32) -> (i32, i32, i32) {
    %c0_i32 = arith.constant 0 : i32
    %c0_i32_0 = arith.constant 0 : i32
    %c0_i32_1 = arith.constant 0 : i32
    return %arg0, %c0_i32, %c0_i32_0 : i32, i32, i32
  }
  func.func @transform_1(%arg0: i32, %arg1: i32) -> (i32, i32, i32) {
    %c0_i32 = arith.constant 0 : i32
    %c0_i32_0 = arith.constant 0 : i32
    %c0_i32_1 = arith.constant 0 : i32
    return %arg0, %c0_i32, %c0_i32_0 : i32, i32, i32
  }
  func.func @transform_2(%arg0: i32, %arg1: i32) -> (i32, i32, i32) {
    %c0_i32 = arith.constant 0 : i32
    %c0_i32_0 = arith.constant 0 : i32
    %c0_i32_1 = arith.constant 0 : i32
    return %arg0, %c0_i32, %c0_i32_0 : i32, i32, i32
  }
  func.func @transform_3(%arg0: i32, %arg1: i32) -> (i32, i32, i32) {
    %c0_i32 = arith.constant 0 : i32
    %c0_i32_0 = arith.constant 0 : i32
    return %arg0, %arg1, %c0_i32 : i32, i32, i32
  }
}

</mosaic_0001>

<llo_original>
// kernel: tpu_custom_call.1
$region0: #{tpu_custom_call.1}
  #allocation0 [shape = 'u32[]', space=smem, size = 0x4, offset = 0x4, fixed_abs, tag = 'smem constant byte address 0x4 - core index']
  #allocation1 [shape = 'u32[144,128]{1,0:T(1,128)}', space=vmem, size = 0x12000, scoped, tag = 'internal scratch']
  %s0 = inlined_call_operand.vmem [shape: f32[2,1,128], index: 0, kind: input, shape index: {}]
  %s1 = inlined_call_operand.vmem [shape: f32[2,1,128], index: 1, kind: input, shape index: {}]
  %s2 = inlined_call_operand.vmem [shape: f32[2,128,32], index: 2, kind: input, shape index: {}]
  %s3 = inlined_call_operand.vmem [shape: f32[2,64,32], index: 3, kind: output, shape index: {}]
  %s4 = sld [smem:[#allocation0]]
  $region45: #{tpu_custom_call.1} parent=0
    _
  %s6 = ssub.s32 1, %s4
  %s7 = scalar_select 0, %s6, %s4
  loop: start=0, step=1, limit=4
  $region2: #{tpu_custom_call.1} parent=0 // loop_pre_header
    _
  $region3: #{tpu_custom_call.1} parent=0 // loop_header
    %s9 = sphi 0, %s13
    %p10 = scmp.ge.s32.totalorder %s9, 4
    %s16 = sphi 0, %s28
    %s17 = sphi 0, %s24
    %s18 = sphi 0, %s16
    %s19 = sphi 0, %s17
    %s20 = sphi 0, %s18
    %s21 = sphi 0, %s19
    %s31 = sphi 0, %s33
    %s34 = sphi 0, %s31
    %s35 = sphi 0, %s34
    %s51 = sphi 0, %s35
    %s57 = sphi 0, %s59
    %s60 = sphi 0, %s57
    %s61 = sphi 0, %s60
    %s77 = sphi 0, %s61
    %s83 = sphi 0, %s85
    %s86 = sphi 0, %s83
    %s87 = sphi 0, %s86
    %s103 = sphi 0, %s87
    %s111 = sphi 0, %s113
    %s114 = sphi 0, %s111
    %s115 = sphi 0, %s114
    %s131 = sphi 0, %s115
  $region4: #{tpu_custom_call.1} parent=0 // loop_header_branch
    %12 = sbr.rel (%p10) target = $region8
  $region5: #{tpu_custom_call.1} parent=0 // loop_body
    %s14 = ssub.s32 %s9, 1
    %s15 = ssub.s32 %s9, 2
    %s22 = sadd.s32 1, %s17
    %p23 = scmp.ge.s32.totalorder %s22, 1
    %s24 = scalar_select %p23, 0, %s22
    %s25 = sadd.s32 1, %s16
    %s26 = scalar_select %p23, %s25, %s16
    %p27 = scmp.ge.s32.totalorder %s26, 2
    %s28 = scalar_select %p27, 0, %s26
    %s29 = ssub.s32 %s16, %s28
    %p30 = scmp.eq.s32.totalorder %s29, 0
    %s32 = sadd.s32 %s31, 1
    %s33 = scalar_select %p30, %s31, %s32
    %p36 = pneg %p30
    %p37 = scmp.eq.s32.totalorder %s9, 1
    %p38 = por %p36, %p37
    %p39 = scmp.ne.s32.totalorder %s31, %s34
    %p40 = scmp.eq.s32.totalorder %s9, 0
    %p41 = por %p39, %p40
    %p42 = scmp.ne.s32.totalorder %s31, %s34
    %p43 = scmp.eq.s32.totalorder %s14, 1
    %p44 = por %p42, %p43
    %p45 = scmp.ne.s32.totalorder %s34, %s35
    %p46 = scmp.eq.s32.totalorder %s14, 0
    %p47 = por %p45, %p46
    %p48 = scmp.ne.s32.totalorder %s34, %s35
    %p49 = scmp.eq.s32.totalorder %s15, 1
    %p50 = por %p48, %p49
    %p52 = scmp.ne.s32.totalorder %s35, %s51
    %p53 = scmp.eq.s32.totalorder %s15, 0
    %p54 = por %p52, %p53
    %s55 = ssub.s32 %s16, %s28
    %p56 = scmp.eq.s32.totalorder %s55, 0
    %s58 = sadd.s32 %s57, 1
    %s59 = scalar_select %p56, %s57, %s58
    %p62 = pneg %p56
    %p63 = scmp.eq.s32.totalorder %s9, 1
    %p64 = por %p62, %p63
    %p65 = scmp.ne.s32.totalorder %s57, %s60
    %p66 = scmp.eq.s32.totalorder %s9, 0
    %p67 = por %p65, %p66
    %p68 = scmp.ne.s32.totalorder %s57, %s60
    %p69 = scmp.eq.s32.totalorder %s14, 1
    %p70 = por %p68, %p69
    %p71 = scmp.ne.s32.totalorder %s60, %s61
    %p72 = scmp.eq.s32.totalorder %s14, 0
    %p73 = por %p71, %p72
    %p74 = scmp.ne.s32.totalorder %s60, %s61
    %p75 = scmp.eq.s32.totalorder %s15, 1
    %p76 = por %p74, %p75
    %p78 = scmp.ne.s32.totalorder %s61, %s77
    %p79 = scmp.eq.s32.totalorder %s15, 0
    %p80 = por %p78, %p79
    %s81 = ssub.s32 %s16, %s28
    %p82 = scmp.eq.s32.totalorder %s81, 0
    %s84 = sadd.s32 %s83, 1
    %s85 = scalar_select %p82, %s83, %s84
    %p88 = pneg %p82
    %p89 = scmp.eq.s32.totalorder %s9, 1
    %p90 = por %p88, %p89
    %p91 = scmp.ne.s32.totalorder %s83, %s86
    %p92 = scmp.eq.s32.totalorder %s9, 0
    %p93 = por %p91, %p92
    %p94 = scmp.ne.s32.totalorder %s83, %s86
    %p95 = scmp.eq.s32.totalorder %s14, 1
    %p96 = por %p94, %p95
    %p97 = scmp.ne.s32.totalorder %s86, %s87
    %p98 = scmp.eq.s32.totalorder %s14, 0
    %p99 = por %p97, %p98
    %p100 = scmp.ne.s32.totalorder %s86, %s87
    %p101 = scmp.eq.s32.totalorder %s15, 1
    %p102 = por %p100, %p101
    %p104 = scmp.ne.s32.totalorder %s87, %s103
    %p105 = scmp.eq.s32.totalorder %s15, 0
    %p106 = por %p104, %p105
    %s107 = ssub.s32 %s16, %s28
    %s108 = ssub.s32 %s17, %s24
    %s109 = sor.u32 %s107, %s108
    %p110 = scmp.eq.s32.totalorder %s109, 0
    %s112 = sadd.s32 %s111, 1
    %s113 = scalar_select %p110, %s111, %s112
    %p116 = pneg %p110
    %p117 = scmp.eq.s32.totalorder %s9, 1
    %p118 = por %p116, %p117
    %p119 = scmp.ne.s32.totalorder %s111, %s114
    %p120 = scmp.eq.s32.totalorder %s9, 0
    %p121 = por %p119, %p120
    %p122 = scmp.ne.s32.totalorder %s111, %s114
    %p123 = scmp.eq.s32.totalorder %s14, 1
    %p124 = por %p122, %p123
    %p125 = scmp.ne.s32.totalorder %s114, %s115
    %p126 = scmp.eq.s32.totalorder %s14, 0
    %p127 = por %p125, %p126
    %p128 = scmp.ne.s32.totalorder %s114, %s115
    %p129 = scmp.eq.s32.totalorder %s15, 1
    %p130 = por %p128, %p129
    %p132 = scmp.ne.s32.totalorder %s115, %s131
    %p133 = scmp.eq.s32.totalorder %s15, 0
    %p134 = por %p132, %p133
    %p135 = scmp.le.s32.totalorder 1, %s9
    %p136 = scmp.lt.s32.totalorder %s9, 3
    %p137 = pnand %p135, %p136
    %p138 = pneg %p137
    // Predicated region
    $region9: #{tpu_custom_call.1} parent=5 // pred_check
      _
    $region10: #{tpu_custom_call.1} parent=5 // pred_check_branch
      %140 = sbr.rel (%p137) target = $region12
    $region11: #{tpu_custom_call.1} parent=5 // pred_region
      %s141 = ssub.s32 %s9, 1
    $region12: #{tpu_custom_call.1} parent=5 // pred_fallthru
      _
    %p142 = scmp.lt.s32.totalorder %s9, 2
    // Predicated region
    $region13: #{tpu_custom_call.1} parent=5 // pred_check
      %p143 = pneg %p142
    $region14: #{tpu_custom_call.1} parent=5 // pred_check_branch
      %145 = sbr.rel (%p143) target = $region16
    $region15: #{tpu_custom_call.1} parent=5 // pred_region
      // Predicated region
      $region17: #{tpu_custom_call.1} parent=15 // pred_check
        %p146 = pneg %p41
      $region18: #{tpu_custom_call.1} parent=15 // pred_check_branch
        %148 = sbr.rel (%p146) target = $region20
      $region19: #{tpu_custom_call.1} parent=15 // pred_region
        %p149 = scmp.lt.s32.totalorder %s16, 1
        %s150 = scalar_select %p149, %s16, 1
        %s151 = scalar_lea.vmem %s0, %s150
      $region20: #{tpu_custom_call.1} parent=15 // pred_fallthru
        _
      // Predicated region
      $region21: #{tpu_custom_call.1} parent=15 // pred_check
        %p152 = pneg %p67
      $region22: #{tpu_custom_call.1} parent=15 // pred_check_branch
        %154 = sbr.rel (%p152) target = $region24
      $region23: #{tpu_custom_call.1} parent=15 // pred_region
        %p155 = scmp.lt.s32.totalorder %s16, 1
        %s156 = scalar_select %p155, %s16, 1
        %s157 = scalar_lea.vmem %s1, %s156
      $region24: #{tpu_custom_call.1} parent=15 // pred_fallthru
        _
      // Predicated region
      $region25: #{tpu_custom_call.1} parent=15 // pred_check
        %p158 = pneg %p93
      $region26: #{tpu_custom_call.1} parent=15 // pred_check_branch
        %160 = sbr.rel (%p158) target = $region28
      $region27: #{tpu_custom_call.1} parent=15 // pred_region
        %p161 = scmp.lt.s32.totalorder %s16, 1
        %s162 = scalar_select %p161, %s16, 1
        %s163 = smul.addr %s162, 16
        %s164 = smul.addr %s163, 8
        %s165 = scalar_lea.vmem %s2, %s164
      $region28: #{tpu_custom_call.1} parent=15 // pred_fallthru
        _
    $region16: #{tpu_custom_call.1} parent=5 // pred_fallthru
      _
    %p166 = scmp.le.s32.totalorder 1, %s9
    %p167 = scmp.lt.s32.totalorder %s9, 3
    %p168 = pnand %p166, %p167
    %p169 = pneg %p168
    // Predicated region
    $region29: #{tpu_custom_call.1} parent=5 // pred_check
      _
    $region30: #{tpu_custom_call.1} parent=5 // pred_check_branch
      %171 = sbr.rel (%p168) target = $region32
    $region31: #{tpu_custom_call.1} parent=5 // pred_region
      %s172 = ssub.s32 %s9, 1
      %p173 = scmp.lt.s32.totalorder %s18, 1
      %s174 = scalar_select %p173, %s18, 1
      %s175 = scalar_lea.vmem %s0, %s174
      %p176 = pneg %p47
      %p177 = pneg %p44
      %p178 = scmp.lt.s32.totalorder %s18, 1
      %s179 = scalar_select %p178, %s18, 1
      %s180 = scalar_lea.vmem %s1, %s179
      %p181 = pneg %p73
      %p182 = pneg %p70
      %p183 = scmp.lt.s32.totalorder %s18, 1
      %s184 = scalar_select %p183, %s18, 1
      %s185 = smul.addr %s184, 16
      %s186 = smul.addr %s185, 8
      %s187 = scalar_lea.vmem %s2, %s186
      %p188 = pneg %p99
      %p189 = pneg %p96
      %p190 = pneg %p127
      %p191 = pneg %p124
      %s192 = smul.u32 8, %s19
      %p193 = scmp.lt.s32.totalorder %s18, 1
      %s194 = scalar_select %p193, %s18, 1
      %p195 = scmp.lt.s32.totalorder %s192, 7
      %s196 = scalar_select %p195, %s192, 7
      %s197 = smul.addr %s194, 8
      %s198 = sadd.s32 %s196, %s197
      %s199 = smul.addr %s198, 8
      %s200 = scalar_lea.vmem %s3, %s199
      %p201 = scmp.lt.s32.totalorder %s18, 1
      %s202 = scalar_select %p201, %s18, 1
      %s203 = scalar_lea.vmem %s0, %s202
      %p204 = scmp.lt.s32.totalorder %s18, 1
      %s205 = scalar_select %p204, %s18, 1
      %s206 = scalar_lea.vmem %s1, %s205
      %p207 = scmp.lt.s32.totalorder %s18, 1
      %s208 = scalar_select %p207, %s18, 1
      %s209 = smul.addr %s208, 16
      %s210 = smul.addr %s209, 8
      %s211 = scalar_lea.vmem %s2, %s210
      %s212 = smul.u32 8, %s19
      %p213 = scmp.lt.s32.totalorder %s18, 1
      %s214 = scalar_select %p213, %s18, 1
      %p215 = scmp.lt.s32.totalorder %s212, 7
      %s216 = scalar_select %p215, %s212, 7
      %s217 = smul.addr %s214, 8
      %s218 = sadd.s32 %s216, %s217
      %s219 = smul.addr %s218, 8
      %s220 = scalar_lea.vmem %s3, %s219
      %s221 = smul.u32 8, %s19
      %s222 = smul.u32 %s19, 64
      %v223 = vld [vmem:[%s203] sm:$0x1]
      %v224 = vld [vmem:[%s206] sm:$0x1]
      %v225 = vlaneseq
      %v226 = vshrl.u32 %v225, 7
      %v227 = vadd.s32 %v226, 8
      %v228 = vadd.s32 %v226, 16
      %v229 = vadd.s32 %v226, 24
      %v230 = vadd.s32 %v226, 32
      %v231 = vadd.s32 %v226, 40
      %v232 = vadd.s32 %v226, 48
      %v233 = vadd.s32 %v226, 56
      %v234 = vstv %s222
      %v235 = vadd.s32 %v226, %v234
      %v236 = vadd.s32 %v227, %v234
      %v237 = vadd.s32 %v228, %v234
      %v238 = vadd.s32 %v229, %v234
      %v239 = vadd.s32 %v230, %v234
      %v240 = vadd.s32 %v231, %v234
      %v241 = vadd.s32 %v232, %v234
      %v242 = vadd.s32 %v233, %v234
      %v243 = vcvt.s32.f32 %v235
      %v244 = vcvt.s32.f32 %v236
      %v245 = vcvt.s32.f32 %v237
      %v246 = vcvt.s32.f32 %v238
      %v247 = vcvt.s32.f32 %v239
      %v248 = vcvt.s32.f32 %v240
      %v249 = vcvt.s32.f32 %v241
      %v250 = vcvt.s32.f32 %v242
      %v252 = vlaneseq
      %v253 = vshrl.u32 %v252, 7
      %v254 = vsub.s32 0, %v253
      %v255 = vrot.slane %v223, %v254
      %vm257 = vcmp.ge.f32.partialorder %v243, %v255
      %vm258 = vcmp.ge.f32.partialorder %v244, %v255
      %vm259 = vcmp.ge.f32.partialorder %v245, %v255
      %vm260 = vcmp.ge.f32.partialorder %v246, %v255
      %vm261 = vcmp.ge.f32.partialorder %v247, %v255
      %vm262 = vcmp.ge.f32.partialorder %v248, %v255
      %vm263 = vcmp.ge.f32.partialorder %v249, %v255
      %vm264 = vcmp.ge.f32.partialorder %v250, %v255
      %v266 = vlaneseq
      %v267 = vshrl.u32 %v266, 7
      %v268 = vsub.s32 0, %v267
      %v269 = vrot.slane %v224, %v268
      %vm271 = vcmp.lt.f32.partialorder %v243, %v269
      %vm272 = vcmp.lt.f32.partialorder %v244, %v269
      %vm273 = vcmp.lt.f32.partialorder %v245, %v269
      %vm274 = vcmp.lt.f32.partialorder %v246, %v269
      %vm275 = vcmp.lt.f32.partialorder %v247, %v269
      %vm276 = vcmp.lt.f32.partialorder %v248, %v269
      %vm277 = vcmp.lt.f32.partialorder %v249, %v269
      %vm278 = vcmp.lt.f32.partialorder %v250, %v269
      %vm279 = vmand %vm257, %vm271
      %vm280 = vmand %vm258, %vm272
      %vm281 = vmand %vm259, %vm273
      %vm282 = vmand %vm260, %vm274
      %vm283 = vmand %vm261, %vm275
      %vm284 = vmand %vm262, %vm276
      %vm285 = vmand %vm263, %vm277
      %vm286 = vmand %vm264, %vm278
      %v287 = vsel %vm279, 1, 0
      %v288 = vsel %vm280, 1, 0
      %v289 = vsel %vm281, 1, 0
      %v290 = vsel %vm282, 1, 0
      %v291 = vsel %vm283, 1, 0
      %v292 = vsel %vm284, 1, 0
      %v293 = vsel %vm285, 1, 0
      %v294 = vsel %vm286, 1, 0
      %v295 = vcvt.s32.f32 %v287
      %v296 = vcvt.s32.f32 %v288
      %v297 = vcvt.s32.f32 %v289
      %v298 = vcvt.s32.f32 %v290
      %v299 = vcvt.s32.f32 %v291
      %v300 = vcvt.s32.f32 %v292
      %v301 = vcvt.s32.f32 %v293
      %v302 = vcvt.s32.f32 %v294
      %v303 = vld [vmem:[%s211] sm:$0xff]
      %v304 = vld [vmem:[%s211 + $0x8] sm:$0xff]
      %v305 = vld [vmem:[%s211 + $0x10] sm:$0xff]
      %v306 = vld [vmem:[%s211 + $0x18] sm:$0xff]
      %v307 = vld [vmem:[%s211 + $0x20] sm:$0xff]
      %v308 = vld [vmem:[%s211 + $0x28] sm:$0xff]
      %v309 = vld [vmem:[%s211 + $0x30] sm:$0xff]
      %v310 = vld [vmem:[%s211 + $0x38] sm:$0xff]
      %v311 = vld [vmem:[%s211 + $0x40] sm:$0xff]
      %v312 = vld [vmem:[%s211 + $0x48] sm:$0xff]
      %v313 = vld [vmem:[%s211 + $0x50] sm:$0xff]
      %v314 = vld [vmem:[%s211 + $0x58] sm:$0xff]
      %v315 = vld [vmem:[%s211 + $0x60] sm:$0xff]
      %v316 = vld [vmem:[%s211 + $0x68] sm:$0xff]
      %v317 = vld [vmem:[%s211 + $0x70] sm:$0xff]
      %v318 = vld [vmem:[%s211 + $0x78] sm:$0xff]
      %319 = vmatprep.subr.mxu0 0.0
      %320 = vmatpush1.msra.mxu0 %v318
      %321 = vmatprep.subr.mxu0 0.0
      %322 = vmatpush1.msra.mxu0 %v317
      %323 = vmatprep.subr.mxu0 0.0
      %324 = vmatpush1.msra.mxu0 %v316
      %325 = vmatprep.subr.mxu0 0.0
      %326 = vmatpush1.msra.mxu0 %v315
      %327 = vmatprep.subr.mxu0 0.0
      %328 = vmatpush1.msra.mxu0 %v314
      %329 = vmatprep.subr.mxu0 0.0
      %330 = vmatpush1.msra.mxu0 %v313
      %331 = vmatprep.subr.mxu0 0.0
      %332 = vmatpush1.msra.mxu0 %v312
      %333 = vmatprep.subr.mxu0 0.0
      %334 = vmatpush1.msra.mxu0 %v311
      %335 = vmatprep.subr.mxu0 0.0
      %336 = vmatpush1.msra.mxu0 %v310
      %337 = vmatprep.subr.mxu0 0.0
      %338 = vmatpush1.msra.mxu0 %v309
      %339 = vmatprep.subr.mxu0 0.0
      %340 = vmatpush1.msra.mxu0 %v308
      %341 = vmatprep.subr.mxu0 0.0
      %342 = vmatpush1.msra.mxu0 %v307
      %343 = vmatprep.subr.mxu0 0.0
      %344 = vmatpush1.msra.mxu0 %v306
      %345 = vmatprep.subr.mxu0 0.0
      %346 = vmatpush1.msra.mxu0 %v305
      %347 = vmatprep.subr.mxu0 0.0
      %348 = vmatpush1.msra.mxu0 %v304
      %349 = vmatprep.subr.mxu0 0.0
      %350 = vmatpush1.msra.mxu0 %v303
      %351 = vmatprep.subr.mxu0 0.0
      %352 = vmatpush2.msra.mxu0 0.0
      %353 = vmatprep.subr.mxu0 0.0
      %354 = vmatpush2.msra.mxu0 0.0
      %355 = vmatprep.subr.mxu0 0.0
      %356 = vmatpush2.msra.mxu0 0.0
      %357 = vmatprep.subr.mxu0 0.0
      %358 = vmatpush2.msra.mxu0 0.0
      %359 = vmatprep.subr.mxu0 0.0
      %360 = vmatpush2.msra.mxu0 0.0
      %361 = vmatprep.subr.mxu0 0.0
      %362 = vmatpush2.msra.mxu0 0.0
      %363 = vmatprep.subr.mxu0 0.0
      %364 = vmatpush2.msra.mxu0 0.0
      %365 = vmatprep.subr.mxu0 0.0
      %366 = vmatpush2.msra.mxu0 0.0
      %367 = vmatprep.subr.mxu0 0.0
      %368 = vmatpush2.msra.mxu0 0.0
      %369 = vmatprep.subr.mxu0 0.0
      %370 = vmatpush2.msra.mxu0 0.0
      %371 = vmatprep.subr.mxu0 0.0
      %372 = vmatpush2.msra.mxu0 0.0
      %373 = vmatprep.subr.mxu0 0.0
      %374 = vmatpush2.msra.mxu0 0.0
      %375 = vmatprep.subr.mxu0 0.0
      %376 = vmatpush2.msra.mxu0 0.0
      %377 = vmatprep.subr.mxu0 0.0
      %378 = vmatpush2.msra.mxu0 0.0
      %379 = vmatprep.subr.mxu0 0.0
      %380 = vmatpush2.msra.mxu0 0.0
      %381 = vmatprep.subr.mxu0 0.0
      %382 = vmatpush2.msra.mxu0 0.0
      %383 = vmatprep.mubr.f32.mxu0 0.0
      %384 = vmatmul.mubr.f32.gmra.mxu0 %v295
      %v385 = vpop.f32.mrf.mxu0
      %v386 = vadd.f32 0.0, %v385
      %v387 = vpop.f32.mrf.mxu0
      %388 = vmatprep.mubr.f32.mxu0 0.0
      %389 = vmatmul.mubr.f32.gmra.mxu0 %v296
      %v390 = vpop.f32.mrf.mxu0
      %v391 = vadd.f32 0.0, %v390
      %v392 = vpop.f32.mrf.mxu0
      %393 = vmatprep.mubr.f32.mxu0 0.0
      %394 = vmatmul.mubr.f32.gmra.mxu0 %v297
      %v395 = vpop.f32.mrf.mxu0
      %v396 = vadd.f32 0.0, %v395
      %v397 = vpop.f32.mrf.mxu0
      %398 = vmatprep.mubr.f32.mxu0 0.0
      %399 = vmatmul.mubr.f32.gmra.mxu0 %v298
      %v400 = vpop.f32.mrf.mxu0
      %v401 = vadd.f32 0.0, %v400
      %v402 = vpop.f32.mrf.mxu0
      %403 = vmatprep.mubr.f32.mxu0 0.0
      %404 = vmatmul.mubr.f32.gmra.mxu0 %v299
      %v405 = vpop.f32.mrf.mxu0
      %v406 = vadd.f32 0.0, %v405
      %v407 = vpop.f32.mrf.mxu0
      %408 = vmatprep.mubr.f32.mxu0 0.0
      %409 = vmatmul.mubr.f32.gmra.mxu0 %v300
      %v410 = vpop.f32.mrf.mxu0
      %v411 = vadd.f32 0.0, %v410
      %v412 = vpop.f32.mrf.mxu0
      %413 = vmatprep.mubr.f32.mxu0 0.0
      %414 = vmatmul.mubr.f32.gmra.mxu0 %v301
      %v415 = vpop.f32.mrf.mxu0
      %v416 = vadd.f32 0.0, %v415
      %v417 = vpop.f32.mrf.mxu0
      %418 = vmatprep.mubr.f32.mxu0 0.0
      %419 = vmatmul.mubr.f32.gmra.mxu0 %v302
      %v420 = vpop.f32.mrf.mxu0
      %v421 = vadd.f32 0.0, %v420
      %v422 = vpop.f32.mrf.mxu0
      %423 = vdwg.mxu0
      %vm424 = vcmask 261120
      %425 = vst.msk [vmem:[%s220] sm:$0xff] %vm424, %v386
      %426 = vst.msk [vmem:[%s220 + $0x8] sm:$0xff] %vm424, %v391
      %427 = vst.msk [vmem:[%s220 + $0x10] sm:$0xff] %vm424, %v396
      %428 = vst.msk [vmem:[%s220 + $0x18] sm:$0xff] %vm424, %v401
      %429 = vst.msk [vmem:[%s220 + $0x20] sm:$0xff] %vm424, %v406
      %430 = vst.msk [vmem:[%s220 + $0x28] sm:$0xff] %vm424, %v411
      %431 = vst.msk [vmem:[%s220 + $0x30] sm:$0xff] %vm424, %v416
      %432 = vst.msk [vmem:[%s220 + $0x38] sm:$0xff] %vm424, %v421
      %s433 = smul.u32 8, %s19
      %p434 = scmp.lt.s32.totalorder %s18, 1
      %s435 = scalar_select %p434, %s18, 1
      %p436 = scmp.lt.s32.totalorder %s433, 7
      %s437 = scalar_select %p436, %s433, 7
      %s438 = smul.addr %s435, 8
      %s439 = sadd.s32 %s437, %s438
      %s440 = smul.addr %s439, 8
      %s441 = scalar_lea.vmem %s3, %s440
      // Predicated region
      $region33: #{tpu_custom_call.1} parent=31 // pred_check
        %p442 = pneg %p124
      $region34: #{tpu_custom_call.1} parent=31 // pred_check_branch
        %444 = sbr.rel (%p442) target = $region36
      $region35: #{tpu_custom_call.1} parent=31 // pred_region
        %s445 = smul.u32 8, %s19
      $region36: #{tpu_custom_call.1} parent=31 // pred_fallthru
        _
    $region32: #{tpu_custom_call.1} parent=5 // pred_fallthru
      _
    %p446 = scmp.le.s32.totalorder 2, %s9
    // Predicated region
    $region37: #{tpu_custom_call.1} parent=5 // pred_check
      %p447 = pneg %p446
    $region38: #{tpu_custom_call.1} parent=5 // pred_check_branch
      %449 = sbr.rel (%p447) target = $region40
    $region39: #{tpu_custom_call.1} parent=5 // pred_region
      %s450 = ssub.s32 %s9, 2
      // Predicated region
      $region41: #{tpu_custom_call.1} parent=39 // pred_check
        %p451 = pneg %p130
      $region42: #{tpu_custom_call.1} parent=39 // pred_check_branch
        %453 = sbr.rel (%p451) target = $region44
      $region43: #{tpu_custom_call.1} parent=39 // pred_region
        %s454 = smul.u32 8, %s21
        %p455 = scmp.lt.s32.totalorder %s20, 1
        %s456 = scalar_select %p455, %s20, 1
        %p457 = scmp.lt.s32.totalorder %s454, 7
        %s458 = scalar_select %p457, %s454, 7
        %s459 = smul.addr %s456, 8
        %s460 = sadd.s32 %s458, %s459
        %s461 = smul.addr %s460, 8
        %s462 = scalar_lea.vmem %s3, %s461
      $region44: #{tpu_custom_call.1} parent=39 // pred_fallthru
        _
    $region40: #{tpu_custom_call.1} parent=5 // pred_fallthru
      _
  $region6: #{tpu_custom_call.1} parent=0 // loop_footer
    %s13 = sadd.s32 1, %s9
  $region7: #{tpu_custom_call.1} parent=0 // loop_footer_branch
    %8 = sbr.rel target = $region3
  $region8: #{tpu_custom_call.1} parent=0 // loop_exit
    _

</llo_original>
